<compile_context>
chip_gen: v7x
topology: tpu7x:2x2x1
jax: 0.10.0
libtpu: 0.0.40
codegen_flags: <defaults>
</compile_context>

<pallas_src>
import functools

import jax
import jax.numpy as jnp
from jax.experimental import pallas as pl
from jax.experimental.pallas import tpu as pltpu


def _patch_pool_kernel(x_ref, p_ref, o_ref, acc_ref, *, inv_area):
    # x_ref: (TB, TK)   p_ref: (TK, NP_out)   o_ref: (TB, NP_out)
    # acc_ref: (TB, NP_out) f32 accumulator across the K (= H*W) grid axis.
    k = pl.program_id(1)

    @pl.when(k == 0)
    def _():
        acc_ref[...] = jnp.zeros_like(acc_ref)

    acc_ref[...] += jnp.dot(
        x_ref[...], p_ref[...], preferred_element_type=jnp.float32
    )

    @pl.when(k == pl.num_programs(1) - 1)
    def _():
        o_ref[...] = (acc_ref[...] * inv_area).astype(o_ref.dtype)


def base_patch_embed(x, patch_size, *, force_pallas=False):
    # layout: input NCHW (B, C, H, W) exactly like the PyTorch module;
    #         output (B, C, nPatchesH, nPatchesW).
    B, C, H, W = x.shape
    assert H % patch_size == 0 and W % patch_size == 0
    nH, nW = H // patch_size, W // patch_size

    # Tiny-problem fallback: below ~1 MiB of input the pallas_call launch /
    # DMA-setup overhead dominates; a fused XLA reduction is faster.
    if not force_pallas and x.size * x.dtype.itemsize < (1 << 20):
        pooled = x.reshape(B, C, nH, patch_size, nW, patch_size).mean(axis=(3, 5))
        return pooled.astype(x.dtype)

    N, HW, NP = B * C, H * W, nH * nW
    # Output columns: keep NP as-is when NP < 128 (full-dim block, masked vst,
    # no write amplification); round up to a 128 multiple when NP is large so
    # stores are unmasked lane-dense vst.
    NP_out = NP if NP < 128 else ((NP + 127) // 128) * 128

    itemsize = x.dtype.itemsize
    p_dtype = jnp.bfloat16 if x.dtype == jnp.bfloat16 else jnp.float32
    p_itemsize = jnp.dtype(p_dtype).itemsize

    # Generation-aware VMEM budget (v5e/v6e: 128 MiB physical, v7x: 64 MiB).
    try:
        vmem_cap = int(getattr(pltpu.get_tpu_info(), "vmem_capacity_bytes"))
    except Exception:
        vmem_cap = 64 * 1024 * 1024  # conservative default
    if vmem_cap >= 96 * 1024 * 1024:       # v5e / v6e
        budget, vmem_ceiling = 64 << 20, 100 << 20
    else:                                   # v7x (per TensorCore)
        budget, vmem_ceiling = 22 << 20, 56 << 20

    # ---- K (= H*W) tiling: keep the pooling matrix inside the VMEM budget. ----
    if HW * NP_out * p_itemsize <= budget // 2:
        TK, nk, HW_pad = HW, 1, HW
    else:
        tk_fit = max(128, ((budget // 2) // (2 * NP_out * p_itemsize)) // 128 * 128)
        TK = None
        if HW % 128 == 0:
            # Prefer a TK that divides HW exactly (no zero-padding of x / P).
            for cand in range(min(tk_fit, HW) // 128, 0, -1):
                if (HW // 128) % cand == 0:
                    TK = cand * 128
                    break
        if TK is None:
            TK = min(tk_fit, ((HW + 127) // 128) * 128)
        HW_pad = ((HW + TK - 1) // TK) * TK
        nk = HW_pad // TK

    # ---- Batch (rows = B*C images) tiling. ----
    ROW_ALIGN = 256  # MXU rows (v6e/v7x); also a multiple of 128 (v5e) and 16 (bf16)
    p_block_bytes = (1 if nk == 1 else 2) * TK * NP_out * p_itemsize
    per_row = 2 * (TK + NP_out) * itemsize + NP_out * 4  # dbl-buffered in/out + f32 acc
    tb_max = max(8, (budget - p_block_bytes) // per_row)
    if N < 2 * ROW_ALIGN:
        TB = N if tb_max >= N else max(8, (tb_max // 8) * 8)
    else:
        # >= 2 grid steps: both v7x TensorCores busy + DMA/compute overlap.
        tb_cap = min(tb_max, (N + 1) // 2)
        TB = (tb_cap // ROW_ALIGN) * ROW_ALIGN
        if TB == 0:
            TB = max(8, (tb_cap // 8) * 8)
    nb = pl.cdiv(N, TB)

    # ---- Pooling matrix: P[hw, p] = 1 iff pixel hw lies in patch p, else 0.
    # Entries (0, 1) are exact in bf16/f32; mean scale applied at finalize in f32.
    h_idx = jnp.arange(H)
    w_idx = jnp.arange(W)
    pid = ((h_idx[:, None] // patch_size) * nW
           + (w_idx[None, :] // patch_size)).reshape(HW)
    P = (pid[:, None] == jnp.arange(NP_out)[None, :]).astype(p_dtype)

    x_flat = x.reshape(N, HW)
    if HW_pad > HW:
        # Zero-pad the contraction axis so overhanging K blocks contribute 0.
        x_flat = jnp.pad(x_flat, ((0, 0), (0, HW_pad - HW)))
        P = jnp.pad(P, ((0, HW_pad - HW), (0, 0)))

    need = p_block_bytes + 2 * TB * (TK + NP_out) * itemsize + TB * NP_out * 4
    vmem_limit = int(min(vmem_ceiling, max(need + (2 << 20), 8 << 20)))

    kernel = functools.partial(
        _patch_pool_kernel, inv_area=1.0 / float(patch_size * patch_size))

    def _run(single_buffer_p):
        if single_buffer_p:
            # Pooling matrix is grid-constant when nk == 1 -> single-buffer it.
            p_spec = pl.BlockSpec((TK, NP_out), lambda i, k: (k, 0),
                                  pipeline_mode=pl.Buffered(1))
        else:
            p_spec = pl.BlockSpec((TK, NP_out), lambda i, k: (k, 0))
        return pl.pallas_call(
            kernel,
            out_shape=jax.ShapeDtypeStruct((N, NP_out), x.dtype),
            grid=(nb, nk),
            in_specs=[
                pl.BlockSpec((TB, TK), lambda i, k: (i, k)),   # image rows
                p_spec,                                        # pooling matrix
            ],
            out_specs=pl.BlockSpec((TB, NP_out), lambda i, k: (i, 0)),
            scratch_shapes=[pltpu.VMEM((TB, NP_out), jnp.float32)],
            compiler_params=pltpu.CompilerParams(
                dimension_semantics=("parallel", "arbitrary"),
                vmem_limit_bytes=vmem_limit,
            ),
        )(x_flat, P)

    if nk == 1:
        try:
            out = _run(True)
        except Exception:
            out = _run(False)   # fall back if single-buffering is rejected
    else:
        out = _run(False)

    if NP_out != NP:
        out = out[:, :NP]
    return out.reshape(B, C, nH, nW)


if __name__ == "__main__":
    # Module config consistent with __init__: img_size=16, patch_size=4, in_chans=4
    B, C, H, W = 2, 4, 16, 16
    patch_size = 4

    key = jax.random.PRNGKey(0)
    x = jax.random.normal(key, (B, C, H, W), dtype=jnp.float32)

    # Force the Pallas path (the default would take the tiny-problem fallback).
    out = base_patch_embed(x, patch_size, force_pallas=True)
    out = jax.block_until_ready(out)

    # Reference: per-channel mean over each patch.
    nH, nW = H // patch_size, W // patch_size
    ref = x.reshape(B, C, nH, patch_size, nW, patch_size).mean(axis=(3, 5))

    assert out.shape == (B, C, nH, nW), out.shape
    assert jnp.allclose(out, ref, atol=1e-5, rtol=1e-5), "mismatch vs reference"

    # Default (tiny-problem XLA fallback) path must agree as well.
    out_fb = jax.block_until_ready(base_patch_embed(x, patch_size))
    assert jnp.allclose(out_fb, ref, atol=1e-5, rtol=1e-5), "fallback mismatch"

    print("KERNEL_OK")
</pallas_src>

<mosaic_0001>
module attributes {stable_mosaic.version = 11 : i64} {
  func.func @_patch_pool_kernel(%arg0: i32, %arg1: i32, %arg2: memref<8x256xf32, #tpu.memory_space<vmem>>, %arg3: memref<256x16xf32, #tpu.memory_space<vmem>>, %arg4: memref<8x16xf32, #tpu.memory_space<vmem>>, %arg5: memref<8x16xf32, #tpu.memory_space<vmem>>) attributes {dimension_semantics = [#tpu.dimension_semantics<parallel>, #tpu.dimension_semantics<arbitrary>], iteration_bounds = array<i64: 1, 1>, scalar_prefetch = 0 : i64, scratch_operands = 1 : i64, tpu.core_type = #tpu.core_type<tc>, window_params = [{transform_indices = @transform_0, window_bounds = array<i64: 8, 256>}, {pipeline_mode = #tpu.pipeline_mode<synchronous>, transform_indices = @transform_1, window_bounds = array<i64: 256, 16>}, {transform_indices = @transform_2, window_bounds = array<i64: 8, 16>}]} {
    %c0_i32 = arith.constant 0 : i32
    %0 = arith.cmpi eq, %arg1, %c0_i32 : i32
    %1 = arith.extui %0 : i1 to i32
    %c0_i32_0 = arith.constant 0 : i32
    %2 = arith.cmpi ne, %1, %c0_i32_0 : i32
    scf.if %2 {
      %cst_10 = arith.constant 0.000000e+00 : f32
      %12 = vector.broadcast %cst_10 : f32 to vector<8x16xf32>
      %c0_11 = arith.constant 0 : index
      %c0_12 = arith.constant 0 : index
      %13 = vector.load %arg5[%c0_11, %c0_12] : memref<8x16xf32, #tpu.memory_space<vmem>>, vector<8x16xf32>
      tpu.vector_store %arg5[%c0_11, %c0_12], %12 {strides = array<i32>} : memref<8x16xf32, #tpu.memory_space<vmem>>, vector<8x16xf32>,
    } else {
    }
    %c0 = arith.constant 0 : index
    %c0_1 = arith.constant 0 : index
    %3 = vector.load %arg5[%c0, %c0_1] : memref<8x16xf32, #tpu.memory_space<vmem>>, vector<8x16xf32>
    %c0_2 = arith.constant 0 : index
    %c0_3 = arith.constant 0 : index
    %4 = vector.load %arg2[%c0_2, %c0_3] : memref<8x256xf32, #tpu.memory_space<vmem>>, vector<8x256xf32>
    %c0_4 = arith.constant 0 : index
    %c0_5 = arith.constant 0 : index
    %5 = vector.load %arg3[%c0_4, %c0_5] : memref<256x16xf32, #tpu.memory_space<vmem>>, vector<256x16xf32>
    %cst = arith.constant dense<0.000000e+00> : vector<8x16xf32>
    %6 = tpu.matmul %4, %5, %cst {dimension_numbers = #tpu.dot_dimension_numbers<[1], [0], [0], [1], [0, 0, 1, 1], [], []>} : vector<8x256xf32>, vector<256x16xf32>, vector<8x16xf32> -> vector<8x16xf32>
    %7 = arith.addf %3, %6 : vector<8x16xf32>
    %c0_6 = arith.constant 0 : index
    %c0_7 = arith.constant 0 : index
    %8 = vector.load %arg5[%c0_6, %c0_7] : memref<8x16xf32, #tpu.memory_space<vmem>>, vector<8x16xf32>
    tpu.vector_store %arg5[%c0_6, %c0_7], %7 {strides = array<i32>} : memref<8x16xf32, #tpu.memory_space<vmem>>, vector<8x16xf32>,
    %c0_i32_8 = arith.constant 0 : i32
    %9 = arith.cmpi eq, %arg1, %c0_i32_8 : i32
    %10 = arith.extui %9 : i1 to i32
    %c0_i32_9 = arith.constant 0 : i32
    %11 = arith.cmpi ne, %10, %c0_i32_9 : i32
    scf.if %11 {
      %c0_10 = arith.constant 0 : index
      %c0_11 = arith.constant 0 : index
      %12 = vector.load %arg5[%c0_10, %c0_11] : memref<8x16xf32, #tpu.memory_space<vmem>>, vector<8x16xf32>
      %cst_12 = arith.constant 6.250000e-02 : f32
      %13 = vector.broadcast %cst_12 : f32 to vector<8x16xf32>
      %14 = arith.mulf %12, %13 : vector<8x16xf32>
      %c0_13 = arith.constant 0 : index
      %c0_14 = arith.constant 0 : index
      %15 = vector.load %arg4[%c0_13, %c0_14] : memref<8x16xf32, #tpu.memory_space<vmem>>, vector<8x16xf32>
      tpu.vector_store %arg4[%c0_13, %c0_14], %14 {strides = array<i32>} : memref<8x16xf32, #tpu.memory_space<vmem>>, vector<8x16xf32>,
    } else {
    }
    return
  }
  func.func @transform_0(%arg0: i32, %arg1: i32) -> (i32, i32) {
    %c0_i32 = arith.constant 0 : i32
    return %arg0, %arg1 : i32, i32
  }
  func.func @transform_1(%arg0: i32, %arg1: i32) -> (i32, i32) {
    %c0_i32 = arith.constant 0 : i32
    %c0_i32_0 = arith.constant 0 : i32
    return %arg1, %c0_i32 : i32, i32
  }
  func.func @transform_2(%arg0: i32, %arg1: i32) -> (i32, i32) {
    %c0_i32 = arith.constant 0 : i32
    %c0_i32_0 = arith.constant 0 : i32
    return %arg0, %c0_i32 : i32, i32
  }
}

module attributes {stable_mosaic.version = 11 : i64} {
  func.func @_patch_pool_kernel(%arg0: i32, %arg1: i32, %arg2: memref<8x256xf32, #tpu.memory_space<vmem>>, %arg3: memref<256x16xf32, #tpu.memory_space<vmem>>, %arg4: memref<8x16xf32, #tpu.memory_space<vmem>>, %arg5: memref<8x16xf32, #tpu.memory_space<vmem>>) attributes {dimension_semantics = [#tpu.dimension_semantics<parallel>, #tpu.dimension_semantics<arbitrary>], iteration_bounds = array<i64: 1, 1>, scalar_prefetch = 0 : i64, scratch_operands = 1 : i64, tpu.core_type = #tpu.core_type<tc>, window_params = [{transform_indices = @transform_0, window_bounds = array<i64: 8, 256>}, {transform_indices = @transform_1, window_bounds = array<i64: 256, 16>}, {transform_indices = @transform_2, window_bounds = array<i64: 8, 16>}]} {
    %c0_i32 = arith.constant 0 : i32
    %0 = arith.cmpi eq, %arg1, %c0_i32 : i32
    %1 = arith.extui %0 : i1 to i32
    %c0_i32_0 = arith.constant 0 : i32
    %2 = arith.cmpi ne, %1, %c0_i32_0 : i32
    scf.if %2 {
      %cst_10 = arith.constant 0.000000e+00 : f32
      %12 = vector.broadcast %cst_10 : f32 to vector<8x16xf32>
      %c0_11 = arith.constant 0 : index
      %c0_12 = arith.constant 0 : index
      %13 = vector.load %arg5[%c0_11, %c0_12] : memref<8x16xf32, #tpu.memory_space<vmem>>, vector<8x16xf32>
      tpu.vector_store %arg5[%c0_11, %c0_12], %12 {strides = array<i32>} : memref<8x16xf32, #tpu.memory_space<vmem>>, vector<8x16xf32>,
    } else {
    }
    %c0 = arith.constant 0 : index
    %c0_1 = arith.constant 0 : index
    %3 = vector.load %arg5[%c0, %c0_1] : memref<8x16xf32, #tpu.memory_space<vmem>>, vector<8x16xf32>
    %c0_2 = arith.constant 0 : index
    %c0_3 = arith.constant 0 : index
    %4 = vector.load %arg2[%c0_2, %c0_3] : memref<8x256xf32, #tpu.memory_space<vmem>>, vector<8x256xf32>
    %c0_4 = arith.constant 0 : index
    %c0_5 = arith.constant 0 : index
    %5 = vector.load %arg3[%c0_4, %c0_5] : memref<256x16xf32, #tpu.memory_space<vmem>>, vector<256x16xf32>
    %cst = arith.constant dense<0.000000e+00> : vector<8x16xf32>
    %6 = tpu.matmul %4, %5, %cst {dimension_numbers = #tpu.dot_dimension_numbers<[1], [0], [0], [1], [0, 0, 1, 1], [], []>} : vector<8x256xf32>, vector<256x16xf32>, vector<8x16xf32> -> vector<8x16xf32>
    %7 = arith.addf %3, %6 : vector<8x16xf32>
    %c0_6 = arith.constant 0 : index
    %c0_7 = arith.constant 0 : index
    %8 = vector.load %arg5[%c0_6, %c0_7] : memref<8x16xf32, #tpu.memory_space<vmem>>, vector<8x16xf32>
    tpu.vector_store %arg5[%c0_6, %c0_7], %7 {strides = array<i32>} : memref<8x16xf32, #tpu.memory_space<vmem>>, vector<8x16xf32>,
    %c0_i32_8 = arith.constant 0 : i32
    %9 = arith.cmpi eq, %arg1, %c0_i32_8 : i32
    %10 = arith.extui %9 : i1 to i32
    %c0_i32_9 = arith.constant 0 : i32
    %11 = arith.cmpi ne, %10, %c0_i32_9 : i32
    scf.if %11 {
      %c0_10 = arith.constant 0 : index
      %c0_11 = arith.constant 0 : index
      %12 = vector.load %arg5[%c0_10, %c0_11] : memref<8x16xf32, #tpu.memory_space<vmem>>, vector<8x16xf32>
      %cst_12 = arith.constant 6.250000e-02 : f32
      %13 = vector.broadcast %cst_12 : f32 to vector<8x16xf32>
      %14 = arith.mulf %12, %13 : vector<8x16xf32>
      %c0_13 = arith.constant 0 : index
      %c0_14 = arith.constant 0 : index
      %15 = vector.load %arg4[%c0_13, %c0_14] : memref<8x16xf32, #tpu.memory_space<vmem>>, vector<8x16xf32>
      tpu.vector_store %arg4[%c0_13, %c0_14], %14 {strides = array<i32>} : memref<8x16xf32, #tpu.memory_space<vmem>>, vector<8x16xf32>,
    } else {
    }
    return
  }
  func.func @transform_0(%arg0: i32, %arg1: i32) -> (i32, i32) {
    %c0_i32 = arith.constant 0 : i32
    return %arg0, %arg1 : i32, i32
  }
  func.func @transform_1(%arg0: i32, %arg1: i32) -> (i32, i32) {
    %c0_i32 = arith.constant 0 : i32
    %c0_i32_0 = arith.constant 0 : i32
    return %arg1, %c0_i32 : i32, i32
  }
  func.func @transform_2(%arg0: i32, %arg1: i32) -> (i32, i32) {
    %c0_i32 = arith.constant 0 : i32
    %c0_i32_0 = arith.constant 0 : i32
    return %arg0, %c0_i32 : i32, i32
  }
}

</mosaic_0001>

<llo_original>
// kernel: tpu_custom_call.1
$region0: #{tpu_custom_call.1}
  #allocation0 [shape = 'u32[]', space=smem, size = 0x4, offset = 0x4, fixed_abs, tag = 'smem constant byte address 0x4 - core index']
  #allocation1 [shape = 'u32[144,128]{1,0:T(1,128)}', space=vmem, size = 0x12000, scoped, tag = 'internal scratch']
  #allocation2 [shape = 'f32[8,16]{1,0:T(8,128)}', space=vmem, size = 0x1000, scoped, tag = 'scratch operand']
  %s0 = inlined_call_operand.vmem [shape: f32[8,256], index: 0, kind: input, shape index: {}]
  %s1 = inlined_call_operand.vmem [shape: f32[256,16], index: 1, kind: input, shape index: {}]
  %s2 = inlined_call_operand.hbm [shape: f32[8,16], index: 2, kind: output, shape index: {}]
  %s3 = sld [smem:[#allocation0]]
  $region26: #{tpu_custom_call.1} parent=0
    _
  %s5 = ssub.s32 1, %s3
  %s6 = scalar_select 0, %s5, %s3
  $region1: #{tpu_custom_call.1} parent=0
    #allocation3 [shape = 'u8[4096]{0}', space=vmem, size = 0x1000, scoped, tag = 'output window, operand 0, single buffered']
    #allocation4 [shape = 's32[1]{0}', space=sflag, size = 0x4, scoped, tag = 'scoped memory for tpu_custom_call.1']
    %7 = vsyncpa [#allocation4], 0
    // Predicated region
    $region2: #{tpu_custom_call.1} parent=1 // pred_check
      _
    $region3: #{tpu_custom_call.1} parent=1 // pred_check_branch
      %9 = sbr.rel (0) target = $region5
    $region4: #{tpu_custom_call.1} parent=1 // pred_region
      _
    $region5: #{tpu_custom_call.1} parent=1 // pred_fallthru
      _
    // Predicated region
    $region6: #{tpu_custom_call.1} parent=1 // pred_check
      _
    $region7: #{tpu_custom_call.1} parent=1 // pred_check_branch
      %11 = sbr.rel (0) target = $region9
    $region8: #{tpu_custom_call.1} parent=1 // pred_region
      _
    $region9: #{tpu_custom_call.1} parent=1 // pred_fallthru
      _
    %p12 = scmp.eq.s32.totalorder 0, 0
    // Predicated region
    $region10: #{tpu_custom_call.1} parent=1 // pred_check
      %p13 = pneg %p12
    $region11: #{tpu_custom_call.1} parent=1 // pred_check_branch
      %15 = sbr.rel (%p13) target = $region13
    $region12: #{tpu_custom_call.1} parent=1 // pred_region
      %vm16 = vcmask 130048
      %17 = vst.msk [vmem:[#allocation2] sm:$0xff] %vm16, 0.0
    $region13: #{tpu_custom_call.1} parent=1 // pred_fallthru
      _
    %v18 = vld [vmem:[#allocation2] sm:$0xff]
    %v19 = vld [vmem:[%s0] sm:$0xff]
    %v20 = vld [vmem:[%s0 + $0x8] sm:$0xff]
    %v21 = vld [vmem:[%s1] sm:$0xff]
    %v22 = vld [vmem:[%s1 + $0x8] sm:$0xff]
    %v23 = vld [vmem:[%s1 + $0x10] sm:$0xff]
    %v24 = vld [vmem:[%s1 + $0x18] sm:$0xff]
    %v25 = vld [vmem:[%s1 + $0x20] sm:$0xff]
    %v26 = vld [vmem:[%s1 + $0x28] sm:$0xff]
    %v27 = vld [vmem:[%s1 + $0x30] sm:$0xff]
    %v28 = vld [vmem:[%s1 + $0x38] sm:$0xff]
    %v29 = vld [vmem:[%s1 + $0x40] sm:$0xff]
    %v30 = vld [vmem:[%s1 + $0x48] sm:$0xff]
    %v31 = vld [vmem:[%s1 + $0x50] sm:$0xff]
    %v32 = vld [vmem:[%s1 + $0x58] sm:$0xff]
    %v33 = vld [vmem:[%s1 + $0x60] sm:$0xff]
    %v34 = vld [vmem:[%s1 + $0x68] sm:$0xff]
    %v35 = vld [vmem:[%s1 + $0x70] sm:$0xff]
    %v36 = vld [vmem:[%s1 + $0x78] sm:$0xff]
    %v37 = vld [vmem:[%s1 + $0x80] sm:$0xff]
    %v38 = vld [vmem:[%s1 + $0x88] sm:$0xff]
    %v39 = vld [vmem:[%s1 + $0x90] sm:$0xff]
    %v40 = vld [vmem:[%s1 + $0x98] sm:$0xff]
    %v41 = vld [vmem:[%s1 + $0xa0] sm:$0xff]
    %v42 = vld [vmem:[%s1 + $0xa8] sm:$0xff]
    %v43 = vld [vmem:[%s1 + $0xb0] sm:$0xff]
    %v44 = vld [vmem:[%s1 + $0xb8] sm:$0xff]
    %v45 = vld [vmem:[%s1 + $0xc0] sm:$0xff]
    %v46 = vld [vmem:[%s1 + $0xc8] sm:$0xff]
    %v47 = vld [vmem:[%s1 + $0xd0] sm:$0xff]
    %v48 = vld [vmem:[%s1 + $0xd8] sm:$0xff]
    %v49 = vld [vmem:[%s1 + $0xe0] sm:$0xff]
    %v50 = vld [vmem:[%s1 + $0xe8] sm:$0xff]
    %v51 = vld [vmem:[%s1 + $0xf0] sm:$0xff]
    %v52 = vld [vmem:[%s1 + $0xf8] sm:$0xff]
    %53 = vmatprep.subr.mxu0 0.0
    %54 = vmatpush1.msra.mxu0 %v21
    %55 = vmatprep.subr.mxu0 0.0
    %56 = vmatpush1.msra.mxu0 %v22
    %57 = vmatprep.subr.mxu0 0.0
    %58 = vmatpush1.msra.mxu0 %v23
    %59 = vmatprep.subr.mxu0 0.0
    %60 = vmatpush1.msra.mxu0 %v24
    %61 = vmatprep.subr.mxu0 0.0
    %62 = vmatpush1.msra.mxu0 %v25
    %63 = vmatprep.subr.mxu0 0.0
    %64 = vmatpush1.msra.mxu0 %v26
    %65 = vmatprep.subr.mxu0 0.0
    %66 = vmatpush1.msra.mxu0 %v27
    %67 = vmatprep.subr.mxu0 0.0
    %68 = vmatpush1.msra.mxu0 %v28
    %69 = vmatprep.subr.mxu0 0.0
    %70 = vmatpush1.msra.mxu0 %v29
    %71 = vmatprep.subr.mxu0 0.0
    %72 = vmatpush1.msra.mxu0 %v30
    %73 = vmatprep.subr.mxu0 0.0
    %74 = vmatpush1.msra.mxu0 %v31
    %75 = vmatprep.subr.mxu0 0.0
    %76 = vmatpush1.msra.mxu0 %v32
    %77 = vmatprep.subr.mxu0 0.0
    %78 = vmatpush1.msra.mxu0 %v33
    %79 = vmatprep.subr.mxu0 0.0
    %80 = vmatpush1.msra.mxu0 %v34
    %81 = vmatprep.subr.mxu0 0.0
    %82 = vmatpush1.msra.mxu0 %v35
    %83 = vmatprep.subr.mxu0 0.0
    %84 = vmatpush1.msra.mxu0 %v36
    %85 = vmatprep.subr.mxu0 0.0
    %86 = vmatpush1.msra.mxu0 %v37
    %87 = vmatprep.subr.mxu0 0.0
    %88 = vmatpush1.msra.mxu0 %v38
    %89 = vmatprep.subr.mxu0 0.0
    %90 = vmatpush1.msra.mxu0 %v39
    %91 = vmatprep.subr.mxu0 0.0
    %92 = vmatpush1.msra.mxu0 %v40
    %93 = vmatprep.subr.mxu0 0.0
    %94 = vmatpush1.msra.mxu0 %v41
    %95 = vmatprep.subr.mxu0 0.0
    %96 = vmatpush1.msra.mxu0 %v42
    %97 = vmatprep.subr.mxu0 0.0
    %98 = vmatpush1.msra.mxu0 %v43
    %99 = vmatprep.subr.mxu0 0.0
    %100 = vmatpush1.msra.mxu0 %v44
    %101 = vmatprep.subr.mxu0 0.0
    %102 = vmatpush1.msra.mxu0 %v45
    %103 = vmatprep.subr.mxu0 0.0
    %104 = vmatpush1.msra.mxu0 %v46
    %105 = vmatprep.subr.mxu0 0.0
    %106 = vmatpush1.msra.mxu0 %v47
    %107 = vmatprep.subr.mxu0 0.0
    %108 = vmatpush1.msra.mxu0 %v48
    %109 = vmatprep.subr.mxu0 0.0
    %110 = vmatpush1.msra.mxu0 %v49
    %111 = vmatprep.subr.mxu0 0.0
    %112 = vmatpush1.msra.mxu0 %v50
    %113 = vmatprep.subr.mxu0 0.0
    %114 = vmatpush1.msra.mxu0 %v51
    %115 = vmatprep.subr.mxu0 0.0
    %116 = vmatpush1.msra.mxu0 %v52
    %117 = vmatprep.mubr.f32.mxu0 %v20
    %118 = vmatmul.mubr.f32.gmra.mrb[0].mxu0 %v19
    %v119 = vpop.f32.mrb[0].mxu0
    %v120 = vadd.f32 0.0, %v119
    %v121 = vpop.f32.mrb[0].mxu0
    %122 = vdwg.mxu0
    %v123 = vadd.f32 %v18, %v120
    %vm124 = vcmask 130048
    %125 = vst.msk [vmem:[#allocation2] sm:$0xff] %vm124, %v123
    // Predicated region
    $region14: #{tpu_custom_call.1} parent=1 // pred_check
      %p126 = pneg %p12
    $region15: #{tpu_custom_call.1} parent=1 // pred_check_branch
      %128 = sbr.rel (%p126) target = $region17
    $region16: #{tpu_custom_call.1} parent=1 // pred_region
      %v129 = vld [vmem:[#allocation2] sm:$0xff]
      %v130 = vmul.f32 %v129, 0.0625
      %131 = vst.msk [vmem:[#allocation3] sm:$0xff] %vm124, %v130
    $region17: #{tpu_custom_call.1} parent=1 // pred_fallthru
      _
    // Predicated region
    $region18: #{tpu_custom_call.1} parent=1 // pred_check
      _
    $region19: #{tpu_custom_call.1} parent=1 // pred_check_branch
      %133 = sbr.rel (0) target = $region21
    $region20: #{tpu_custom_call.1} parent=1 // pred_region
      %s135 = ssub.s32 128, 128
      %136 = vsyncadd [#allocation4], %s135
      %s138 = sshll.u32 [#allocation3], 4
      %s139 = int_to_ptr.vmem [resolvable:$true] %s138
      %141 = dma.vmem_to_hbm [thread:$0]  %s139, 128, %s2, [#allocation4]
    $region21: #{tpu_custom_call.1} parent=1 // pred_fallthru
      _
    // Predicated region
    $region22: #{tpu_custom_call.1} parent=1 // pred_check
      _
    $region23: #{tpu_custom_call.1} parent=1 // pred_check_branch
      %143 = sbr.rel (0) target = $region25
    $region24: #{tpu_custom_call.1} parent=1 // pred_region
      %144 = dma.done [#allocation4], 128
    $region25: #{tpu_custom_call.1} parent=1 // pred_fallthru
      _
    %145 = vsyncpa [#allocation4], 1

// kernel: tpu_custom_call.1
$region0: #{tpu_custom_call.1}
  #allocation0 [shape = 'u32[]', space=smem, size = 0x4, offset = 0x4, fixed_abs, tag = 'smem constant byte address 0x4 - core index']
  #allocation1 [shape = 'u32[144,128]{1,0:T(1,128)}', space=vmem, size = 0x12000, scoped, tag = 'internal scratch']
  #allocation2 [shape = 'f32[8,16]{1,0:T(8,128)}', space=vmem, size = 0x1000, scoped, tag = 'scratch operand']
  %s0 = inlined_call_operand.vmem [shape: f32[8,256], index: 0, kind: input, shape index: {}]
  %s1 = inlined_call_operand.vmem [shape: f32[256,16], index: 1, kind: input, shape index: {}]
  %s2 = inlined_call_operand.hbm [shape: f32[8,16], index: 2, kind: output, shape index: {}]
  %s3 = sld [smem:[#allocation0]]
  $region26: #{tpu_custom_call.1} parent=0
    _
  %s5 = ssub.s32 1, %s3
  %s6 = scalar_select 0, %s5, %s3
  $region1: #{tpu_custom_call.1} parent=0
    #allocation3 [shape = 'u8[4096]{0}', space=vmem, size = 0x1000, scoped, tag = 'output window, operand 0, single buffered']
    #allocation4 [shape = 's32[1]{0}', space=sflag, size = 0x4, scoped, tag = 'scoped memory for tpu_custom_call.1']
    %7 = vsyncpa [#allocation4], 0
    // Predicated region
    $region2: #{tpu_custom_call.1} parent=1 // pred_check
      _
    $region3: #{tpu_custom_call.1} parent=1 // pred_check_branch
      %9 = sbr.rel (0) target = $region5
    $region4: #{tpu_custom_call.1} parent=1 // pred_region
      _
    $region5: #{tpu_custom_call.1} parent=1 // pred_fallthru
      _
    // Predicated region
    $region6: #{tpu_custom_call.1} parent=1 // pred_check
      _
    $region7: #{tpu_custom_call.1} parent=1 // pred_check_branch
      %11 = sbr.rel (0) target = $region9
    $region8: #{tpu_custom_call.1} parent=1 // pred_region
      _
    $region9: #{tpu_custom_call.1} parent=1 // pred_fallthru
      _
    %p12 = scmp.eq.s32.totalorder 0, 0
    // Predicated region
    $region10: #{tpu_custom_call.1} parent=1 // pred_check
      %p13 = pneg %p12
    $region11: #{tpu_custom_call.1} parent=1 // pred_check_branch
      %15 = sbr.rel (%p13) target = $region13
    $region12: #{tpu_custom_call.1} parent=1 // pred_region
      %vm16 = vcmask 130048
      %17 = vst.msk [vmem:[#allocation2] sm:$0xff] %vm16, 0.0
    $region13: #{tpu_custom_call.1} parent=1 // pred_fallthru
      _
    %v18 = vld [vmem:[#allocation2] sm:$0xff]
    %v19 = vld [vmem:[%s0] sm:$0xff]
    %v20 = vld [vmem:[%s0 + $0x8] sm:$0xff]
    %v21 = vld [vmem:[%s1] sm:$0xff]
    %v22 = vld [vmem:[%s1 + $0x8] sm:$0xff]
    %v23 = vld [vmem:[%s1 + $0x10] sm:$0xff]
    %v24 = vld [vmem:[%s1 + $0x18] sm:$0xff]
    %v25 = vld [vmem:[%s1 + $0x20] sm:$0xff]
    %v26 = vld [vmem:[%s1 + $0x28] sm:$0xff]
    %v27 = vld [vmem:[%s1 + $0x30] sm:$0xff]
    %v28 = vld [vmem:[%s1 + $0x38] sm:$0xff]
    %v29 = vld [vmem:[%s1 + $0x40] sm:$0xff]
    %v30 = vld [vmem:[%s1 + $0x48] sm:$0xff]
    %v31 = vld [vmem:[%s1 + $0x50] sm:$0xff]
    %v32 = vld [vmem:[%s1 + $0x58] sm:$0xff]
    %v33 = vld [vmem:[%s1 + $0x60] sm:$0xff]
    %v34 = vld [vmem:[%s1 + $0x68] sm:$0xff]
    %v35 = vld [vmem:[%s1 + $0x70] sm:$0xff]
    %v36 = vld [vmem:[%s1 + $0x78] sm:$0xff]
    %v37 = vld [vmem:[%s1 + $0x80] sm:$0xff]
    %v38 = vld [vmem:[%s1 + $0x88] sm:$0xff]
    %v39 = vld [vmem:[%s1 + $0x90] sm:$0xff]
    %v40 = vld [vmem:[%s1 + $0x98] sm:$0xff]
    %v41 = vld [vmem:[%s1 + $0xa0] sm:$0xff]
    %v42 = vld [vmem:[%s1 + $0xa8] sm:$0xff]
    %v43 = vld [vmem:[%s1 + $0xb0] sm:$0xff]
    %v44 = vld [vmem:[%s1 + $0xb8] sm:$0xff]
    %v45 = vld [vmem:[%s1 + $0xc0] sm:$0xff]
    %v46 = vld [vmem:[%s1 + $0xc8] sm:$0xff]
    %v47 = vld [vmem:[%s1 + $0xd0] sm:$0xff]
    %v48 = vld [vmem:[%s1 + $0xd8] sm:$0xff]
    %v49 = vld [vmem:[%s1 + $0xe0] sm:$0xff]
    %v50 = vld [vmem:[%s1 + $0xe8] sm:$0xff]
    %v51 = vld [vmem:[%s1 + $0xf0] sm:$0xff]
    %v52 = vld [vmem:[%s1 + $0xf8] sm:$0xff]
    %53 = vmatprep.subr.mxu0 0.0
    %54 = vmatpush1.msra.mxu0 %v21
    %55 = vmatprep.subr.mxu0 0.0
    %56 = vmatpush1.msra.mxu0 %v22
    %57 = vmatprep.subr.mxu0 0.0
    %58 = vmatpush1.msra.mxu0 %v23
    %59 = vmatprep.subr.mxu0 0.0
    %60 = vmatpush1.msra.mxu0 %v24
    %61 = vmatprep.subr.mxu0 0.0
    %62 = vmatpush1.msra.mxu0 %v25
    %63 = vmatprep.subr.mxu0 0.0
    %64 = vmatpush1.msra.mxu0 %v26
    %65 = vmatprep.subr.mxu0 0.0
    %66 = vmatpush1.msra.mxu0 %v27
    %67 = vmatprep.subr.mxu0 0.0
    %68 = vmatpush1.msra.mxu0 %v28
    %69 = vmatprep.subr.mxu0 0.0
    %70 = vmatpush1.msra.mxu0 %v29
    %71 = vmatprep.subr.mxu0 0.0
    %72 = vmatpush1.msra.mxu0 %v30
    %73 = vmatprep.subr.mxu0 0.0
    %74 = vmatpush1.msra.mxu0 %v31
    %75 = vmatprep.subr.mxu0 0.0
    %76 = vmatpush1.msra.mxu0 %v32
    %77 = vmatprep.subr.mxu0 0.0
    %78 = vmatpush1.msra.mxu0 %v33
    %79 = vmatprep.subr.mxu0 0.0
    %80 = vmatpush1.msra.mxu0 %v34
    %81 = vmatprep.subr.mxu0 0.0
    %82 = vmatpush1.msra.mxu0 %v35
    %83 = vmatprep.subr.mxu0 0.0
    %84 = vmatpush1.msra.mxu0 %v36
    %85 = vmatprep.subr.mxu0 0.0
    %86 = vmatpush1.msra.mxu0 %v37
    %87 = vmatprep.subr.mxu0 0.0
    %88 = vmatpush1.msra.mxu0 %v38
    %89 = vmatprep.subr.mxu0 0.0
    %90 = vmatpush1.msra.mxu0 %v39
    %91 = vmatprep.subr.mxu0 0.0
    %92 = vmatpush1.msra.mxu0 %v40
    %93 = vmatprep.subr.mxu0 0.0
    %94 = vmatpush1.msra.mxu0 %v41
    %95 = vmatprep.subr.mxu0 0.0
    %96 = vmatpush1.msra.mxu0 %v42
    %97 = vmatprep.subr.mxu0 0.0
    %98 = vmatpush1.msra.mxu0 %v43
    %99 = vmatprep.subr.mxu0 0.0
    %100 = vmatpush1.msra.mxu0 %v44
    %101 = vmatprep.subr.mxu0 0.0
    %102 = vmatpush1.msra.mxu0 %v45
    %103 = vmatprep.subr.mxu0 0.0
    %104 = vmatpush1.msra.mxu0 %v46
    %105 = vmatprep.subr.mxu0 0.0
    %106 = vmatpush1.msra.mxu0 %v47
    %107 = vmatprep.subr.mxu0 0.0
    %108 = vmatpush1.msra.mxu0 %v48
    %109 = vmatprep.subr.mxu0 0.0
    %110 = vmatpush1.msra.mxu0 %v49
    %111 = vmatprep.subr.mxu0 0.0
    %112 = vmatpush1.msra.mxu0 %v50
    %113 = vmatprep.subr.mxu0 0.0
    %114 = vmatpush1.msra.mxu0 %v51
    %115 = vmatprep.subr.mxu0 0.0
    %116 = vmatpush1.msra.mxu0 %v52
    %117 = vmatprep.mubr.f32.mxu0 %v20
    %118 = vmatmul.mubr.f32.gmra.mrb[0].mxu0 %v19
    %v119 = vpop.f32.mrb[0].mxu0
    %v120 = vadd.f32 0.0, %v119
    %v121 = vpop.f32.mrb[0].mxu0
    %122 = vdwg.mxu0
    %v123 = vadd.f32 %v18, %v120
    %vm124 = vcmask 130048
    %125 = vst.msk [vmem:[#allocation2] sm:$0xff] %vm124, %v123
    // Predicated region
    $region14: #{tpu_custom_call.1} parent=1 // pred_check
      %p126 = pneg %p12
    $region15: #{tpu_custom_call.1} parent=1 // pred_check_branch
      %128 = sbr.rel (%p126) target = $region17
    $region16: #{tpu_custom_call.1} parent=1 // pred_region
      %v129 = vld [vmem:[#allocation2] sm:$0xff]
      %v130 = vmul.f32 %v129, 0.0625
      %131 = vst.msk [vmem:[#allocation3] sm:$0xff] %vm124, %v130
    $region17: #{tpu_custom_call.1} parent=1 // pred_fallthru
      _
    // Predicated region
    $region18: #{tpu_custom_call.1} parent=1 // pred_check
      _
    $region19: #{tpu_custom_call.1} parent=1 // pred_check_branch
      %133 = sbr.rel (0) target = $region21
    $region20: #{tpu_custom_call.1} parent=1 // pred_region
      %s135 = ssub.s32 128, 128
      %136 = vsyncadd [#allocation4], %s135
      %s138 = sshll.u32 [#allocation3], 4
      %s139 = int_to_ptr.vmem [resolvable:$true] %s138
      %141 = dma.vmem_to_hbm [thread:$0]  %s139, 128, %s2, [#allocation4]
    $region21: #{tpu_custom_call.1} parent=1 // pred_fallthru
      _
    // Predicated region
    $region22: #{tpu_custom_call.1} parent=1 // pred_check
      _
    $region23: #{tpu_custom_call.1} parent=1 // pred_check_branch
      %143 = sbr.rel (0) target = $region25
    $region24: #{tpu_custom_call.1} parent=1 // pred_region
      %144 = dma.done [#allocation4], 128
    $region25: #{tpu_custom_call.1} parent=1 // pred_fallthru
      _
    %145 = vsyncpa [#allocation4], 1

</llo_original>
